<compile_context>
chip_gen: v5e
topology: v5e:2x2
jax: 0.10.0
libtpu: 0.0.40
codegen_flags: <defaults>
</compile_context>

<pallas_src>
import functools

import jax
import jax.numpy as jnp
from jax.experimental import pallas as pl
from jax.experimental.pallas import tpu as pltpu


def _round_up(v, m):
    return (v + m - 1) // m * m


# ---------------------------------------------------------------------------
# Stage 1: channel mean / channel max reduction (lane-dense, memory-bound).
# ---------------------------------------------------------------------------
def _reduce_kernel(x_ref, red_ref, *, C, c_block):
    # x_ref:   (1, c_block, HW)  one channel chunk of one image (lane-dense)
    # red_ref: (1, 2, HW)        [running channel sum -> mean | running max],
    #                            VMEM-resident across the c grid axis.
    c_idx = pl.program_id(1)
    n_c = pl.num_programs(1)
    HW = x_ref.shape[-1]

    @pl.when(c_idx == 0)
    def _init():
        red_ref[0, 0:1, :] = jnp.zeros((1, HW), jnp.float32)
        red_ref[0, 1:2, :] = jnp.full((1, HW), -jnp.inf, jnp.float32)

    xb = x_ref[0].astype(jnp.float32)                       # (c_block, HW)

    def _accumulate(x_sum, x_max):
        red_ref[0, 0:1, :] = red_ref[0, 0:1, :] + jnp.sum(
            x_sum, axis=0, keepdims=True)
        red_ref[0, 1:2, :] = jnp.maximum(
            red_ref[0, 1:2, :], jnp.max(x_max, axis=0, keepdims=True))

    rem = C % c_block  # static Python int
    if rem == 0:
        # C divides evenly: no masking on any step.
        _accumulate(xb, xb)
    else:
        # Ragged last chunk: mask the out-of-range channels only on that step.
        @pl.when(c_idx < n_c - 1)
        def _full():
            _accumulate(xb, xb)

        @pl.when(c_idx == n_c - 1)
        def _tail():
            ch = jax.lax.broadcasted_iota(jnp.int32, xb.shape, 0)
            valid = ch < rem
            _accumulate(jnp.where(valid, xb, 0.0),
                        jnp.where(valid, xb, -jnp.inf))

    @pl.when(c_idx == n_c - 1)
    def _finalize():
        # Turn the running sum into the channel mean (precomputed 1/C multiply).
        red_ref[0, 0:1, :] = red_ref[0, 0:1, :] * (1.0 / C)


# ---------------------------------------------------------------------------
# Stage 2: 7x7 "same" conv over [mean | max] as K banded-Toeplitz MXU matmuls,
# then sigmoid.  Runs once per image; touches only ~3*H*W floats.
# ---------------------------------------------------------------------------
def _conv_kernel(red_ref, t_ref, o_ref, pad_ref, *, H, W, K):
    # red_ref: (1, 2, H, W)        [mean | max] maps of one image
    # t_ref:   (K, 2W, W)          Toeplitz tensor (horizontal zero-pad baked in)
    # o_ref:   (1, 1, H, W)
    # pad_ref: (H + K - 1, 2W)     row-padded [mean | max], channels packed on lanes
    P = (K - 1) // 2

    # Zero only the K-1 halo rows; the interior is fully overwritten below.
    if P > 0:
        pad_ref[0:P, :] = jnp.zeros((P, 2 * W), jnp.float32)
        pad_ref[P + H:P + H + P, :] = jnp.zeros((P, 2 * W), jnp.float32)
    pad_ref[P:P + H, 0:W] = red_ref[0, 0, :, :].astype(jnp.float32)
    pad_ref[P:P + H, W:2 * W] = red_ref[0, 1, :, :].astype(jnp.float32)

    # out[y, x] = sum_dy  pad[y+dy, :] @ T[dy]  — K small MXU matmuls.
    parts = [
        jnp.dot(pad_ref[dy:dy + H, :], t_ref[dy],
                preferred_element_type=jnp.float32)
        for dy in range(K)
    ]
    # Tree-add the partials (breaks the serial MXU-pop -> VPU-add chain).
    while len(parts) > 1:
        nxt = [parts[i] + parts[i + 1] for i in range(0, len(parts) - 1, 2)]
        if len(parts) % 2:
            nxt.append(parts[-1])
        parts = nxt

    o_ref[0, 0, :, :] = jax.nn.sigmoid(parts[0]).astype(o_ref.dtype)


def _build_toeplitz(conv_weight, W, K):
    """Banded Toeplitz tensor T: (K, 2W, W), horizontal zero-padding baked in.

    T[dy, c*W + j, x] = w[c, dy, j - x + P]  when 0 <= j - x + P < K, else 0,
    so  conv_out[y, x] = sum_dy (pad_row(y+dy) @ T[dy])[x].
    """
    P = (K - 1) // 2
    w2 = conv_weight.reshape(2, K, K).astype(jnp.float32)
    j = jnp.arange(W)[:, None]          # column of the [mean|max] map
    x = jnp.arange(W)[None, :]          # output column
    d = j - x + P                       # tap index dx
    valid = (d >= 0) & (d < K)
    dc = jnp.clip(d, 0, K - 1)
    band = jnp.where(valid[None, None], w2[:, :, dc], 0.0)   # (2, K, W, W)
    return jnp.concatenate([band[0], band[1]], axis=1)       # (K, 2W, W)


def spatial_attention(x, conv_weight, *, c_block=None):
    """x: (N, C, H, W); conv_weight: (1, 2, K, K) -> sigmoid(conv): (N, 1, H, W)."""
    N, C, H, W = x.shape
    K = conv_weight.shape[-1]
    P = (K - 1) // 2
    HW = H * W
    Hp = H + 2 * P

    # ---- Stage 1: lane-dense channel mean/max reduction ---------------------
    x_flat = x.reshape(N, C, HW)        # free: H,W are trailing contiguous dims

    itemsize = jnp.dtype(x.dtype).itemsize
    lanes = _round_up(HW, 128)                       # lane-padded row length
    sub = 8 * max(1, 4 // itemsize)                  # sublane packing (8 f32 / 16 bf16)
    if c_block is None:
        # Padded per-block cap of 4 MiB: double-buffered (8 MiB) this fits
        # comfortably inside v7x's 64 MiB VMEM and the 48 MiB scoped limit,
        # while keeping DMAs large enough to sit near the HBM roofline.
        cap_bytes = 4 * 1024 * 1024
        max_c = max(sub, (cap_bytes // (lanes * itemsize)) // sub * sub)
        c_block = min(C, max_c)
    c_block = int(min(c_block, C))
    n_c = pl.cdiv(C, c_block)           # ragged last chunk is masked in-kernel

    red = pl.pallas_call(
        functools.partial(_reduce_kernel, C=C, c_block=c_block),
        out_shape=jax.ShapeDtypeStruct((N, 2, HW), jnp.float32),
        grid_spec=pltpu.PrefetchScalarGridSpec(
            num_scalar_prefetch=0,
            grid=(N, n_c),
            in_specs=[pl.BlockSpec((1, c_block, HW), lambda n, c: (n, c, 0))],
            out_specs=pl.BlockSpec((1, 2, HW), lambda n, c: (n, 0, 0)),
        ),
        compiler_params=pltpu.CompilerParams(
            dimension_semantics=("parallel", "arbitrary"),
            vmem_limit_bytes=48 * 1024 * 1024,
        ),
    )(x_flat)

    # Free metadata reshape back to 2-D maps for the conv stage.
    red2d = red.reshape(N, 2, H, W)

    # ---- Stage 2: 7x7 conv (Toeplitz matmuls) + sigmoid, once per image -----
    t = _build_toeplitz(conv_weight, W, K)           # (K, 2W, W) f32

    return pl.pallas_call(
        functools.partial(_conv_kernel, H=H, W=W, K=K),
        out_shape=jax.ShapeDtypeStruct((N, 1, H, W), x.dtype),
        grid_spec=pltpu.PrefetchScalarGridSpec(
            num_scalar_prefetch=0,
            grid=(N,),
            in_specs=[
                pl.BlockSpec((1, 2, H, W), lambda n: (n, 0, 0, 0)),
                pl.BlockSpec((K, 2 * W, W), lambda n: (0, 0, 0)),
            ],
            out_specs=pl.BlockSpec((1, 1, H, W), lambda n: (n, 0, 0, 0)),
            scratch_shapes=[pltpu.VMEM((Hp, 2 * W), jnp.float32)],
        ),
        compiler_params=pltpu.CompilerParams(
            dimension_semantics=("parallel",),
        ),
    )(red2d, t)


def _reference(x, conv_weight):
    avg = jnp.mean(x, axis=1, keepdims=True)
    mx = jnp.max(x, axis=1, keepdims=True)
    cat = jnp.concatenate([avg, mx], axis=1)                   # (N, 2, H, W)
    K = conv_weight.shape[-1]
    P = (K - 1) // 2
    y = jax.lax.conv_general_dilated(
        cat, conv_weight, window_strides=(1, 1),
        padding=((P, P), (P, P)),
        dimension_numbers=("NCHW", "OIHW", "NCHW"),
    )
    return jax.nn.sigmoid(y)


if __name__ == "__main__":
    key = jax.random.PRNGKey(0)
    kx, kw = jax.random.split(key)

    N, C, H, W = 2, 4, 16, 16
    KSIZE = 7

    x = jax.random.normal(kx, (N, C, H, W), dtype=jnp.float32)
    # Matches nn.Conv2d(2, 1, 7, bias=False) weight shape.
    conv_weight = 0.1 * jax.random.normal(kw, (1, 2, KSIZE, KSIZE),
                                          dtype=jnp.float32)

    out = jax.block_until_ready(jax.jit(spatial_attention)(x, conv_weight))
    ref = jax.block_until_ready(_reference(x, conv_weight))

    assert out.shape == (N, 1, H, W)
    # Tolerance allows for the MXU's default-precision f32 matmul decomposition
    # differing from XLA's conv path; structural bugs would be O(0.1).
    err = float(jnp.max(jnp.abs(out - ref)))
    assert err < 5e-3, err

    print("KERNEL_OK")
</pallas_src>

<mosaic_0001>
module attributes {stable_mosaic.version = 11 : i64} {
  func.func @_reduce_kernel(%arg0: i32, %arg1: i32, %arg2: memref<1x4x256xf32, #tpu.memory_space<vmem>>, %arg3: memref<1x2x256xf32, #tpu.memory_space<vmem>>) attributes {dimension_semantics = [#tpu.dimension_semantics<parallel>, #tpu.dimension_semantics<arbitrary>], iteration_bounds = array<i64: 2, 1>, scalar_prefetch = 0 : i64, scratch_operands = 0 : i64, tpu.core_type = #tpu.core_type<tc>, window_params = [{transform_indices = @transform_0, window_bounds = array<i64: 1, 4, 256>}, {transform_indices = @transform_1, window_bounds = array<i64: 1, 2, 256>}]} {
    %c0_i32 = arith.constant 0 : i32
    %0 = arith.cmpi eq, %arg1, %c0_i32 : i32
    %1 = arith.extui %0 : i1 to i32
    %c0_i32_0 = arith.constant 0 : i32
    %2 = arith.cmpi ne, %1, %c0_i32_0 : i32
    scf.if %2 {
      %cst_17 = arith.constant 0.000000e+00 : f32
      %24 = vector.broadcast %cst_17 : f32 to vector<1x256xf32>
      %c0_18 = arith.constant 0 : index
      %c0_19 = arith.constant 0 : index
      %c0_20 = arith.constant 0 : index
      %25 = vector.load %arg3[%c0_18, %c0_19, %c0_20] : memref<1x2x256xf32, #tpu.memory_space<vmem>>, vector<1x1x256xf32>
      %26 = vector.shape_cast %25 : vector<1x1x256xf32> to vector<1x256xf32>
      %27 = vector.shape_cast %24 : vector<1x256xf32> to vector<1x1x256xf32>
      tpu.vector_store %arg3[%c0_18, %c0_19, %c0_20], %27 {strides = array<i32>} : memref<1x2x256xf32, #tpu.memory_space<vmem>>, vector<1x1x256xf32>,
      %cst_21 = arith.constant 0xFF800000 : f32
      %28 = vector.broadcast %cst_21 : f32 to vector<1x256xf32>
      %c0_22 = arith.constant 0 : index
      %c1_23 = arith.constant 1 : index
      %c0_24 = arith.constant 0 : index
      %29 = vector.load %arg3[%c0_22, %c1_23, %c0_24] : memref<1x2x256xf32, #tpu.memory_space<vmem>>, vector<1x1x256xf32>
      %30 = vector.shape_cast %29 : vector<1x1x256xf32> to vector<1x256xf32>
      %31 = vector.shape_cast %28 : vector<1x256xf32> to vector<1x1x256xf32>
      tpu.vector_store %arg3[%c0_22, %c1_23, %c0_24], %31 {strides = array<i32>} : memref<1x2x256xf32, #tpu.memory_space<vmem>>, vector<1x1x256xf32>,
    } else {
    }
    %c0 = arith.constant 0 : index
    %c0_1 = arith.constant 0 : index
    %c0_2 = arith.constant 0 : index
    %3 = vector.load %arg2[%c0, %c0_1, %c0_2] : memref<1x4x256xf32, #tpu.memory_space<vmem>>, vector<1x4x256xf32>
    %4 = vector.shape_cast %3 : vector<1x4x256xf32> to vector<4x256xf32>
    %c0_3 = arith.constant 0 : index
    %c0_4 = arith.constant 0 : index
    %c0_5 = arith.constant 0 : index
    %5 = vector.load %arg3[%c0_3, %c0_4, %c0_5] : memref<1x2x256xf32, #tpu.memory_space<vmem>>, vector<1x1x256xf32>
    %6 = vector.shape_cast %5 : vector<1x1x256xf32> to vector<1x256xf32>
    %cst = arith.constant dense<0.000000e+00> : vector<256xf32>
    %7 = vector.multi_reduction <add>, %4, %cst [0] : vector<4x256xf32> to vector<256xf32>
    %8 = vector.shape_cast %7 : vector<256xf32> to vector<1x256xf32>
    %9 = arith.addf %6, %8 : vector<1x256xf32>
    %c0_6 = arith.constant 0 : index
    %c0_7 = arith.constant 0 : index
    %c0_8 = arith.constant 0 : index
    %10 = vector.load %arg3[%c0_6, %c0_7, %c0_8] : memref<1x2x256xf32, #tpu.memory_space<vmem>>, vector<1x1x256xf32>
    %11 = vector.shape_cast %10 : vector<1x1x256xf32> to vector<1x256xf32>
    %12 = vector.shape_cast %9 : vector<1x256xf32> to vector<1x1x256xf32>
    tpu.vector_store %arg3[%c0_6, %c0_7, %c0_8], %12 {strides = array<i32>} : memref<1x2x256xf32, #tpu.memory_space<vmem>>, vector<1x1x256xf32>,
    %c0_9 = arith.constant 0 : index
    %c1 = arith.constant 1 : index
    %c0_10 = arith.constant 0 : index
    %13 = vector.load %arg3[%c0_9, %c1, %c0_10] : memref<1x2x256xf32, #tpu.memory_space<vmem>>, vector<1x1x256xf32>
    %14 = vector.shape_cast %13 : vector<1x1x256xf32> to vector<1x256xf32>
    %cst_11 = arith.constant dense<0xFF800000> : vector<256xf32>
    %15 = vector.multi_reduction <maximumf>, %4, %cst_11 [0] : vector<4x256xf32> to vector<256xf32>
    %16 = vector.shape_cast %15 : vector<256xf32> to vector<1x256xf32>
    %17 = arith.maximumf %14, %16 : vector<1x256xf32>
    %c0_12 = arith.constant 0 : index
    %c1_13 = arith.constant 1 : index
    %c0_14 = arith.constant 0 : index
    %18 = vector.load %arg3[%c0_12, %c1_13, %c0_14] : memref<1x2x256xf32, #tpu.memory_space<vmem>>, vector<1x1x256xf32>
    %19 = vector.shape_cast %18 : vector<1x1x256xf32> to vector<1x256xf32>
    %20 = vector.shape_cast %17 : vector<1x256xf32> to vector<1x1x256xf32>
    tpu.vector_store %arg3[%c0_12, %c1_13, %c0_14], %20 {strides = array<i32>} : memref<1x2x256xf32, #tpu.memory_space<vmem>>, vector<1x1x256xf32>,
    %c0_i32_15 = arith.constant 0 : i32
    %21 = arith.cmpi eq, %arg1, %c0_i32_15 : i32
    %22 = arith.extui %21 : i1 to i32
    %c0_i32_16 = arith.constant 0 : i32
    %23 = arith.cmpi ne, %22, %c0_i32_16 : i32
    scf.if %23 {
      %c0_17 = arith.constant 0 : index
      %c0_18 = arith.constant 0 : index
      %c0_19 = arith.constant 0 : index
      %24 = vector.load %arg3[%c0_17, %c0_18, %c0_19] : memref<1x2x256xf32, #tpu.memory_space<vmem>>, vector<1x1x256xf32>
      %25 = vector.shape_cast %24 : vector<1x1x256xf32> to vector<1x256xf32>
      %cst_20 = arith.constant 2.500000e-01 : f32
      %26 = vector.broadcast %cst_20 : f32 to vector<1x256xf32>
      %27 = arith.mulf %25, %26 : vector<1x256xf32>
      %c0_21 = arith.constant 0 : index
      %c0_22 = arith.constant 0 : index
      %c0_23 = arith.constant 0 : index
      %28 = vector.load %arg3[%c0_21, %c0_22, %c0_23] : memref<1x2x256xf32, #tpu.memory_space<vmem>>, vector<1x1x256xf32>
      %29 = vector.shape_cast %28 : vector<1x1x256xf32> to vector<1x256xf32>
      %30 = vector.shape_cast %27 : vector<1x256xf32> to vector<1x1x256xf32>
      tpu.vector_store %arg3[%c0_21, %c0_22, %c0_23], %30 {strides = array<i32>} : memref<1x2x256xf32, #tpu.memory_space<vmem>>, vector<1x1x256xf32>,
    } else {
    }
    return
  }
  func.func @transform_0(%arg0: i32, %arg1: i32) -> (i32, i32, i32) {
    %c0_i32 = arith.constant 0 : i32
    %c0_i32_0 = arith.constant 0 : i32
    return %arg0, %arg1, %c0_i32 : i32, i32, i32
  }
  func.func @transform_1(%arg0: i32, %arg1: i32) -> (i32, i32, i32) {
    %c0_i32 = arith.constant 0 : i32
    %c0_i32_0 = arith.constant 0 : i32
    %c0_i32_1 = arith.constant 0 : i32
    return %arg0, %c0_i32, %c0_i32_0 : i32, i32, i32
  }
}

module attributes {stable_mosaic.version = 11 : i64} {
  func.func @_conv_kernel(%arg0: i32, %arg1: memref<1x2x16x16xf32, #tpu.memory_space<vmem>>, %arg2: memref<7x32x16xf32, #tpu.memory_space<vmem>>, %arg3: memref<1x1x16x16xf32, #tpu.memory_space<vmem>>, %arg4: memref<22x32xf32, #tpu.memory_space<vmem>>) attributes {dimension_semantics = [#tpu.dimension_semantics<parallel>], iteration_bounds = array<i64: 2>, scalar_prefetch = 0 : i64, scratch_operands = 1 : i64, tpu.core_type = #tpu.core_type<tc>, window_params = [{transform_indices = @transform_0, window_bounds = array<i64: 1, 2, 16, 16>}, {pipeline_mode = #tpu.pipeline_mode<synchronous>, transform_indices = @transform_1, window_bounds = array<i64: 7, 32, 16>}, {transform_indices = @transform_2, window_bounds = array<i64: 1, 1, 16, 16>}]} {
    %cst = arith.constant 0.000000e+00 : f32
    %0 = vector.broadcast %cst : f32 to vector<3x32xf32>
    %c0 = arith.constant 0 : index
    %c0_0 = arith.constant 0 : index
    %1 = vector.load %arg4[%c0, %c0_0] : memref<22x32xf32, #tpu.memory_space<vmem>>, vector<3x32xf32>
    tpu.vector_store %arg4[%c0, %c0_0], %0 {strides = array<i32>} : memref<22x32xf32, #tpu.memory_space<vmem>>, vector<3x32xf32>,
    %cst_1 = arith.constant 0.000000e+00 : f32
    %2 = vector.broadcast %cst_1 : f32 to vector<3x32xf32>
    %c19 = arith.constant 19 : index
    %c0_2 = arith.constant 0 : index
    %3 = vector.load %arg4[%c19, %c0_2] : memref<22x32xf32, #tpu.memory_space<vmem>>, vector<3x32xf32>
    tpu.vector_store %arg4[%c19, %c0_2], %2 {strides = array<i32>} : memref<22x32xf32, #tpu.memory_space<vmem>>, vector<3x32xf32>,
    %c0_3 = arith.constant 0 : index
    %c0_4 = arith.constant 0 : index
    %c0_5 = arith.constant 0 : index
    %c0_6 = arith.constant 0 : index
    %4 = vector.load %arg1[%c0_3, %c0_4, %c0_5, %c0_6] : memref<1x2x16x16xf32, #tpu.memory_space<vmem>>, vector<1x1x16x16xf32>
    %5 = vector.shape_cast %4 : vector<1x1x16x16xf32> to vector<16x16xf32>
    %c3 = arith.constant 3 : index
    %c0_7 = arith.constant 0 : index
    %6 = vector.load %arg4[%c3, %c0_7] : memref<22x32xf32, #tpu.memory_space<vmem>>, vector<16x16xf32>
    tpu.vector_store %arg4[%c3, %c0_7], %5 {strides = array<i32>} : memref<22x32xf32, #tpu.memory_space<vmem>>, vector<16x16xf32>,
    %c0_8 = arith.constant 0 : index
    %c1 = arith.constant 1 : index
    %c0_9 = arith.constant 0 : index
    %c0_10 = arith.constant 0 : index
    %7 = vector.load %arg1[%c0_8, %c1, %c0_9, %c0_10] : memref<1x2x16x16xf32, #tpu.memory_space<vmem>>, vector<1x1x16x16xf32>
    %8 = vector.shape_cast %7 : vector<1x1x16x16xf32> to vector<16x16xf32>
    %c3_11 = arith.constant 3 : index
    %c16 = arith.constant 16 : index
    %9 = vector.load %arg4[%c3_11, %c16] : memref<22x32xf32, #tpu.memory_space<vmem>>, vector<16x16xf32>
    tpu.vector_store %arg4[%c3_11, %c16], %8 {strides = array<i32>} : memref<22x32xf32, #tpu.memory_space<vmem>>, vector<16x16xf32>,
    %c0_12 = arith.constant 0 : index
    %c0_13 = arith.constant 0 : index
    %10 = vector.load %arg4[%c0_12, %c0_13] : memref<22x32xf32, #tpu.memory_space<vmem>>, vector<16x32xf32>
    %c0_14 = arith.constant 0 : index
    %c0_15 = arith.constant 0 : index
    %c0_16 = arith.constant 0 : index
    %11 = vector.load %arg2[%c0_14, %c0_15, %c0_16] : memref<7x32x16xf32, #tpu.memory_space<vmem>>, vector<1x32x16xf32>
    %12 = vector.shape_cast %11 : vector<1x32x16xf32> to vector<32x16xf32>
    %cst_17 = arith.constant dense<0.000000e+00> : vector<16x16xf32>
    %13 = tpu.matmul %10, %12, %cst_17 {dimension_numbers = #tpu.dot_dimension_numbers<[1], [0], [0], [1], [0, 0, 1, 1], [], []>} : vector<16x32xf32>, vector<32x16xf32>, vector<16x16xf32> -> vector<16x16xf32>
    %c1_18 = arith.constant 1 : index
    %c0_19 = arith.constant 0 : index
    %14 = vector.load %arg4[%c1_18, %c0_19] : memref<22x32xf32, #tpu.memory_space<vmem>>, vector<16x32xf32>
    %c1_20 = arith.constant 1 : index
    %c0_21 = arith.constant 0 : index
    %c0_22 = arith.constant 0 : index
    %15 = vector.load %arg2[%c1_20, %c0_21, %c0_22] : memref<7x32x16xf32, #tpu.memory_space<vmem>>, vector<1x32x16xf32>
    %16 = vector.shape_cast %15 : vector<1x32x16xf32> to vector<32x16xf32>
    %cst_23 = arith.constant dense<0.000000e+00> : vector<16x16xf32>
    %17 = tpu.matmul %14, %16, %cst_23 {dimension_numbers = #tpu.dot_dimension_numbers<[1], [0], [0], [1], [0, 0, 1, 1], [], []>} : vector<16x32xf32>, vector<32x16xf32>, vector<16x16xf32> -> vector<16x16xf32>
    %c2 = arith.constant 2 : index
    %c0_24 = arith.constant 0 : index
    %18 = vector.load %arg4[%c2, %c0_24] : memref<22x32xf32, #tpu.memory_space<vmem>>, vector<16x32xf32>
    %c2_25 = arith.constant 2 : index
    %c0_26 = arith.constant 0 : index
    %c0_27 = arith.constant 0 : index
    %19 = vector.load %arg2[%c2_25, %c0_26, %c0_27] : memref<7x32x16xf32, #tpu.memory_space<vmem>>, vector<1x32x16xf32>
    %20 = vector.shape_cast %19 : vector<1x32x16xf32> to vector<32x16xf32>
    %cst_28 = arith.constant dense<0.000000e+00> : vector<16x16xf32>
    %21 = tpu.matmul %18, %20, %cst_28 {dimension_numbers = #tpu.dot_dimension_numbers<[1], [0], [0], [1], [0, 0, 1, 1], [], []>} : vector<16x32xf32>, vector<32x16xf32>, vector<16x16xf32> -> vector<16x16xf32>
    %c3_29 = arith.constant 3 : index
    %c0_30 = arith.constant 0 : index
    %22 = vector.load %arg4[%c3_29, %c0_30] : memref<22x32xf32, #tpu.memory_space<vmem>>, vector<16x32xf32>
    %c3_31 = arith.constant 3 : index
    %c0_32 = arith.constant 0 : index
    %c0_33 = arith.constant 0 : index
    %23 = vector.load %arg2[%c3_31, %c0_32, %c0_33] : memref<7x32x16xf32, #tpu.memory_space<vmem>>, vector<1x32x16xf32>
    %24 = vector.shape_cast %23 : vector<1x32x16xf32> to vector<32x16xf32>
    %cst_34 = arith.constant dense<0.000000e+00> : vector<16x16xf32>
    %25 = tpu.matmul %22, %24, %cst_34 {dimension_numbers = #tpu.dot_dimension_numbers<[1], [0], [0], [1], [0, 0, 1, 1], [], []>} : vector<16x32xf32>, vector<32x16xf32>, vector<16x16xf32> -> vector<16x16xf32>
    %c4 = arith.constant 4 : index
    %c0_35 = arith.constant 0 : index
    %26 = vector.load %arg4[%c4, %c0_35] : memref<22x32xf32, #tpu.memory_space<vmem>>, vector<16x32xf32>
    %c4_36 = arith.constant 4 : index
    %c0_37 = arith.constant 0 : index
    %c0_38 = arith.constant 0 : index
    %27 = vector.load %arg2[%c4_36, %c0_37, %c0_38] : memref<7x32x16xf32, #tpu.memory_space<vmem>>, vector<1x32x16xf32>
    %28 = vector.shape_cast %27 : vector<1x32x16xf32> to vector<32x16xf32>
    %cst_39 = arith.constant dense<0.000000e+00> : vector<16x16xf32>
    %29 = tpu.matmul %26, %28, %cst_39 {dimension_numbers = #tpu.dot_dimension_numbers<[1], [0], [0], [1], [0, 0, 1, 1], [], []>} : vector<16x32xf32>, vector<32x16xf32>, vector<16x16xf32> -> vector<16x16xf32>
    %c5 = arith.constant 5 : index
    %c0_40 = arith.constant 0 : index
    %30 = vector.load %arg4[%c5, %c0_40] : memref<22x32xf32, #tpu.memory_space<vmem>>, vector<16x32xf32>
    %c5_41 = arith.constant 5 : index
    %c0_42 = arith.constant 0 : index
    %c0_43 = arith.constant 0 : index
    %31 = vector.load %arg2[%c5_41, %c0_42, %c0_43] : memref<7x32x16xf32, #tpu.memory_space<vmem>>, vector<1x32x16xf32>
    %32 = vector.shape_cast %31 : vector<1x32x16xf32> to vector<32x16xf32>
    %cst_44 = arith.constant dense<0.000000e+00> : vector<16x16xf32>
    %33 = tpu.matmul %30, %32, %cst_44 {dimension_numbers = #tpu.dot_dimension_numbers<[1], [0], [0], [1], [0, 0, 1, 1], [], []>} : vector<16x32xf32>, vector<32x16xf32>, vector<16x16xf32> -> vector<16x16xf32>
    %c6 = arith.constant 6 : index
    %c0_45 = arith.constant 0 : index
    %34 = vector.load %arg4[%c6, %c0_45] : memref<22x32xf32, #tpu.memory_space<vmem>>, vector<16x32xf32>
    %c6_46 = arith.constant 6 : index
    %c0_47 = arith.constant 0 : index
    %c0_48 = arith.constant 0 : index
    %35 = vector.load %arg2[%c6_46, %c0_47, %c0_48] : memref<7x32x16xf32, #tpu.memory_space<vmem>>, vector<1x32x16xf32>
    %36 = vector.shape_cast %35 : vector<1x32x16xf32> to vector<32x16xf32>
    %cst_49 = arith.constant dense<0.000000e+00> : vector<16x16xf32>
    %37 = tpu.matmul %34, %36, %cst_49 {dimension_numbers = #tpu.dot_dimension_numbers<[1], [0], [0], [1], [0, 0, 1, 1], [], []>} : vector<16x32xf32>, vector<32x16xf32>, vector<16x16xf32> -> vector<16x16xf32>
    %38 = arith.addf %13, %17 : vector<16x16xf32>
    %39 = arith.addf %21, %25 : vector<16x16xf32>
    %40 = arith.addf %29, %33 : vector<16x16xf32>
    %41 = arith.addf %38, %39 : vector<16x16xf32>
    %42 = arith.addf %40, %37 : vector<16x16xf32>
    %43 = arith.addf %41, %42 : vector<16x16xf32>
    %44 = arith.negf %43 : vector<16x16xf32>
    %45 = math.exp %44 : vector<16x16xf32>
    %cst_50 = arith.constant 1.000000e+00 : f32
    %46 = vector.broadcast %cst_50 : f32 to vector<16x16xf32>
    %47 = arith.addf %46, %45 : vector<16x16xf32>
    %48 = arith.divf %46, %47 : vector<16x16xf32>
    %c0_51 = arith.constant 0 : index
    %c0_52 = arith.constant 0 : index
    %c0_53 = arith.constant 0 : index
    %c0_54 = arith.constant 0 : index
    %49 = vector.load %arg3[%c0_51, %c0_52, %c0_53, %c0_54] : memref<1x1x16x16xf32, #tpu.memory_space<vmem>>, vector<1x1x16x16xf32>
    %50 = vector.shape_cast %49 : vector<1x1x16x16xf32> to vector<16x16xf32>
    %51 = vector.shape_cast %48 : vector<16x16xf32> to vector<1x1x16x16xf32>
    tpu.vector_store %arg3[%c0_51, %c0_52, %c0_53, %c0_54], %51 {strides = array<i32>} : memref<1x1x16x16xf32, #tpu.memory_space<vmem>>, vector<1x1x16x16xf32>,
    return
  }
  func.func @transform_0(%arg0: i32) -> (i32, i32, i32, i32) {
    %c0_i32 = arith.constant 0 : i32
    %c0_i32_0 = arith.constant 0 : i32
    %c0_i32_1 = arith.constant 0 : i32
    %c0_i32_2 = arith.constant 0 : i32
    return %arg0, %c0_i32, %c0_i32_0, %c0_i32_1 : i32, i32, i32, i32
  }
  func.func @transform_1(%arg0: i32) -> (i32, i32, i32) {
    %c0_i32 = arith.constant 0 : i32
    %c0_i32_0 = arith.constant 0 : i32
    %c0_i32_1 = arith.constant 0 : i32
    %c0_i32_2 = arith.constant 0 : i32
    return %c0_i32, %c0_i32_0, %c0_i32_1 : i32, i32, i32
  }
  func.func @transform_2(%arg0: i32) -> (i32, i32, i32, i32) {
    %c0_i32 = arith.constant 0 : i32
    %c0_i32_0 = arith.constant 0 : i32
    %c0_i32_1 = arith.constant 0 : i32
    %c0_i32_2 = arith.constant 0 : i32
    return %arg0, %c0_i32, %c0_i32_0, %c0_i32_1 : i32, i32, i32, i32
  }
}

</mosaic_0001>

<llo_original>
// kernel: spatial_attention.2
$region0: #{spatial_attention.2}
  #allocation0 [shape = 'u32[]', space=smem, size = 0x4, offset = 0x4, fixed_abs, tag = 'smem constant byte address 0x4 - core index']
  #allocation1 [shape = 'u32[72,128]{1,0:T(1,128)}', space=vmem, size = 0x9000, scoped, tag = 'internal scratch']
  %s0 = inlined_call_operand.vmem [shape: f32[2,4,256], index: 0, kind: input, shape index: {}]
  %s1 = inlined_call_operand.vmem [shape: f32[2,2,256], index: 1, kind: output, shape index: {}]
  %s2 = sld [smem:[#allocation0]]
  $region45: #{spatial_attention.2} parent=0
    _
  %s4 = ssub.s32 1, %s2
  %s5 = scalar_select 0, %s4, %s2
  loop: start=0, step=1, limit=4
  $region2: #{spatial_attention.2} parent=0 // loop_pre_header
    _
  $region3: #{spatial_attention.2} parent=0 // loop_header
    %s7 = sphi 0, %s11
    %p8 = scmp.ge.s32.totalorder %s7, 4
    %s14 = sphi 0, %s26
    %s15 = sphi 0, %s22
    %s16 = sphi 0, %s14
    %s17 = sphi 0, %s15
    %s18 = sphi 0, %s16
    %s19 = sphi 0, %s17
    %s31 = sphi 0, %s33
    %s34 = sphi 0, %s31
    %s35 = sphi 0, %s34
    %s51 = sphi 0, %s35
    %s57 = sphi 0, %s59
    %s60 = sphi 0, %s57
    %s61 = sphi 0, %s60
    %s77 = sphi 0, %s61
  $region4: #{spatial_attention.2} parent=0 // loop_header_branch
    %10 = sbr.rel (%p8) target = $region8
  $region5: #{spatial_attention.2} parent=0 // loop_body
    %s12 = ssub.s32 %s7, 1
    %s13 = ssub.s32 %s7, 2
    %s20 = sadd.s32 1, %s15
    %p21 = scmp.ge.s32.totalorder %s20, 1
    %s22 = scalar_select %p21, 0, %s20
    %s23 = sadd.s32 1, %s14
    %s24 = scalar_select %p21, %s23, %s14
    %p25 = scmp.ge.s32.totalorder %s24, 2
    %s26 = scalar_select %p25, 0, %s24
    %s27 = ssub.s32 %s14, %s26
    %s28 = ssub.s32 %s15, %s22
    %s29 = sor.u32 %s27, %s28
    %p30 = scmp.eq.s32.totalorder %s29, 0
    %s32 = sadd.s32 %s31, 1
    %s33 = scalar_select %p30, %s31, %s32
    %p36 = pneg %p30
    %p37 = scmp.eq.s32.totalorder %s7, 1
    %p38 = por %p36, %p37
    %p39 = scmp.ne.s32.totalorder %s31, %s34
    %p40 = scmp.eq.s32.totalorder %s7, 0
    %p41 = por %p39, %p40
    %p42 = scmp.ne.s32.totalorder %s31, %s34
    %p43 = scmp.eq.s32.totalorder %s12, 1
    %p44 = por %p42, %p43
    %p45 = scmp.ne.s32.totalorder %s34, %s35
    %p46 = scmp.eq.s32.totalorder %s12, 0
    %p47 = por %p45, %p46
    %p48 = scmp.ne.s32.totalorder %s34, %s35
    %p49 = scmp.eq.s32.totalorder %s13, 1
    %p50 = por %p48, %p49
    %p52 = scmp.ne.s32.totalorder %s35, %s51
    %p53 = scmp.eq.s32.totalorder %s13, 0
    %p54 = por %p52, %p53
    %s55 = ssub.s32 %s14, %s26
    %p56 = scmp.eq.s32.totalorder %s55, 0
    %s58 = sadd.s32 %s57, 1
    %s59 = scalar_select %p56, %s57, %s58
    %p62 = pneg %p56
    %p63 = scmp.eq.s32.totalorder %s7, 1
    %p64 = por %p62, %p63
    %p65 = scmp.ne.s32.totalorder %s57, %s60
    %p66 = scmp.eq.s32.totalorder %s7, 0
    %p67 = por %p65, %p66
    %p68 = scmp.ne.s32.totalorder %s57, %s60
    %p69 = scmp.eq.s32.totalorder %s12, 1
    %p70 = por %p68, %p69
    %p71 = scmp.ne.s32.totalorder %s60, %s61
    %p72 = scmp.eq.s32.totalorder %s12, 0
    %p73 = por %p71, %p72
    %p74 = scmp.ne.s32.totalorder %s60, %s61
    %p75 = scmp.eq.s32.totalorder %s13, 1
    %p76 = por %p74, %p75
    %p78 = scmp.ne.s32.totalorder %s61, %s77
    %p79 = scmp.eq.s32.totalorder %s13, 0
    %p80 = por %p78, %p79
    %p81 = scmp.le.s32.totalorder 1, %s7
    %p82 = scmp.lt.s32.totalorder %s7, 3
    %p83 = pnand %p81, %p82
    %p84 = pneg %p83
    // Predicated region
    $region9: #{spatial_attention.2} parent=5 // pred_check
      _
    $region10: #{spatial_attention.2} parent=5 // pred_check_branch
      %86 = sbr.rel (%p83) target = $region12
    $region11: #{spatial_attention.2} parent=5 // pred_region
      %s87 = ssub.s32 %s7, 1
    $region12: #{spatial_attention.2} parent=5 // pred_fallthru
      _
    %p88 = scmp.lt.s32.totalorder %s7, 2
    // Predicated region
    $region13: #{spatial_attention.2} parent=5 // pred_check
      %p89 = pneg %p88
    $region14: #{spatial_attention.2} parent=5 // pred_check_branch
      %91 = sbr.rel (%p89) target = $region16
    $region15: #{spatial_attention.2} parent=5 // pred_region
      // Predicated region
      $region17: #{spatial_attention.2} parent=15 // pred_check
        %p92 = pneg %p41
      $region18: #{spatial_attention.2} parent=15 // pred_check_branch
        %94 = sbr.rel (%p92) target = $region20
      $region19: #{spatial_attention.2} parent=15 // pred_region
        %p95 = scmp.lt.s32.totalorder %s14, 1
        %s96 = scalar_select %p95, %s14, 1
        %p97 = scmp.lt.s32.totalorder %s15, 0
        %s98 = scalar_select %p97, %s15, 0
        %s99 = smul.addr %s98, 2
        %s100 = smul.addr %s96, 2
        %s101 = sadd.s32 %s99, %s100
        %s102 = smul.addr %s101, 4
        %s103 = scalar_lea.vmem %s0, %s102
      $region20: #{spatial_attention.2} parent=15 // pred_fallthru
        _
    $region16: #{spatial_attention.2} parent=5 // pred_fallthru
      _
    %p104 = scmp.le.s32.totalorder 1, %s7
    %p105 = scmp.lt.s32.totalorder %s7, 3
    %p106 = pnand %p104, %p105
    %p107 = pneg %p106
    // Predicated region
    $region21: #{spatial_attention.2} parent=5 // pred_check
      _
    $region22: #{spatial_attention.2} parent=5 // pred_check_branch
      %109 = sbr.rel (%p106) target = $region24
    $region23: #{spatial_attention.2} parent=5 // pred_region
      %s110 = ssub.s32 %s7, 1
      %p111 = scmp.lt.s32.totalorder %s16, 1
      %s112 = scalar_select %p111, %s16, 1
      %p113 = scmp.lt.s32.totalorder %s17, 0
      %s114 = scalar_select %p113, %s17, 0
      %s115 = smul.addr %s114, 2
      %s116 = smul.addr %s112, 2
      %s117 = sadd.s32 %s115, %s116
      %s118 = smul.addr %s117, 4
      %s119 = scalar_lea.vmem %s0, %s118
      %p120 = pneg %p47
      %p121 = pneg %p44
      %p122 = pneg %p73
      %p123 = pneg %p70
      %p124 = scmp.lt.s32.totalorder %s16, 1
      %s125 = scalar_select %p124, %s16, 1
      %s126 = smul.addr %s125, 2
      %s127 = smul.addr %s126, 2
      %s128 = scalar_lea.vmem %s1, %s127
      %p129 = scmp.lt.s32.totalorder %s16, 1
      %s130 = scalar_select %p129, %s16, 1
      %p131 = scmp.lt.s32.totalorder %s17, 0
      %s132 = scalar_select %p131, %s17, 0
      %s133 = smul.addr %s132, 2
      %s134 = smul.addr %s130, 2
      %s135 = sadd.s32 %s133, %s134
      %s136 = smul.addr %s135, 4
      %s137 = scalar_lea.vmem %s0, %s136
      %p138 = scmp.lt.s32.totalorder %s16, 1
      %s139 = scalar_select %p138, %s16, 1
      %s140 = smul.addr %s139, 2
      %s141 = smul.addr %s140, 2
      %s142 = scalar_lea.vmem %s1, %s141
      %p143 = scmp.eq.s32.totalorder %s17, 0
      // Predicated region
      $region25: #{spatial_attention.2} parent=23 // pred_check
        %p144 = pneg %p143
      $region26: #{spatial_attention.2} parent=23 // pred_check_branch
        %146 = sbr.rel (%p144) target = $region28
      $region27: #{spatial_attention.2} parent=23 // pred_region
        %v147 = vlaneseq
        %vm148 = vcmp.ge.s32.totalorder %v147, 0
        %vm149 = vcmp.lt.s32.totalorder %v147, 256
        %vm150 = vmand %vm148, %vm149
        %151 = vst.msk [vmem:[%s142] ss:$2 sm:$0x3] %vm150, 0.0
        %s152 = scalar_lea.vmem %s142, 1
        %153 = vst.msk [vmem:[%s152] ss:$2 sm:$0x3] %vm150, -inf
      $region28: #{spatial_attention.2} parent=23 // pred_fallthru
        _
      %v154 = vld [vmem:[%s137] sm:$0xff]
      %v155 = vld [vmem:[%s142] ss:$2 sm:$0x3]
      %157 = vst [vmem:[#allocation1] ss:$2 sm:$0xff] %v154
      %v158 = vld.sshfl [vmem:[#allocation1] sm:$0xff pattern:$0x75316420]
      %v159 = vld.sshfl [vmem:[#allocation1 + $0x8] sm:$0xff pattern:$0x75316420]
      %vm162 = vcmask 1043456
      %v163 = vsel %vm162, %v158, 0.0
      %v164 = vrot.slane %v163, 4
      %v165 = vadd.f32 %v163, %v164
      %v166 = vrot.slane %v165, 2
      %v167 = vadd.f32 %v165, %v166
      %v168 = vrot.slane %v167, 1
      %v169 = vadd.f32 %v167, %v168
      %v170 = vsel %vm162, %v159, 0.0
      %v171 = vrot.slane %v170, 4
      %v172 = vadd.f32 %v170, %v171
      %v173 = vrot.slane %v172, 2
      %v174 = vadd.f32 %v172, %v173
      %v175 = vrot.slane %v174, 1
      %v176 = vadd.f32 %v174, %v175
      %v179 = vrot.slane %v176, 7
      %vm180 = vcmask 1040384
      %v181 = vsel %vm180, %v169, %v179
      %v183 = vadd.f32 %v155, %v181
      %v184 = vlaneseq
      %vm185 = vcmp.ge.s32.totalorder %v184, 0
      %vm186 = vcmp.lt.s32.totalorder %v184, 256
      %vm187 = vmand %vm185, %vm186
      %188 = vst.msk [vmem:[%s142] ss:$2 sm:$0x3] %vm187, %v183
      %s189 = scalar_lea.vmem %s142, 1
      %v190 = vld [vmem:[%s189] ss:$2 sm:$0x3]
      %191 = vst [vmem:[#allocation1] ss:$2 sm:$0xff] %v154
      %v192 = vld.sshfl [vmem:[#allocation1] sm:$0xff pattern:$0x75316420]
      %v193 = vld.sshfl [vmem:[#allocation1 + $0x8] sm:$0xff pattern:$0x75316420]
      %v196 = vsel %vm162, %v192, -inf
      %v197 = vrot.slane %v196, 4
      %v198 = vmax.f32 %v196, %v197
      %v199 = vrot.slane %v198, 2
      %v200 = vmax.f32 %v198, %v199
      %v201 = vrot.slane %v200, 1
      %v202 = vmax.f32 %v200, %v201
      %v203 = vsel %vm162, %v193, -inf
      %v204 = vrot.slane %v203, 4
      %v205 = vmax.f32 %v203, %v204
      %v206 = vrot.slane %v205, 2
      %v207 = vmax.f32 %v205, %v206
      %v208 = vrot.slane %v207, 1
      %v209 = vmax.f32 %v207, %v208
      %v212 = vrot.slane %v209, 7
      %v213 = vsel %vm180, %v202, %v212
      %v215 = vmax.f32 %v190, %v213
      %216 = vst.msk [vmem:[%s189] ss:$2 sm:$0x3] %vm187, %v215
      // Predicated region
      $region29: #{spatial_attention.2} parent=23 // pred_check
        %p217 = pneg %p143
      $region30: #{spatial_attention.2} parent=23 // pred_check_branch
        %219 = sbr.rel (%p217) target = $region32
      $region31: #{spatial_attention.2} parent=23 // pred_region
        %v220 = vld [vmem:[%s142] ss:$2 sm:$0x3]
        %v221 = vmul.f32 %v220, 0.25
        %222 = vst.msk [vmem:[%s142] ss:$2 sm:$0x3] %vm187, %v221
      $region32: #{spatial_attention.2} parent=23 // pred_fallthru
        _
      %p223 = scmp.lt.s32.totalorder %s16, 1
      %s224 = scalar_select %p223, %s16, 1
      %s225 = smul.addr %s224, 2
      %s226 = smul.addr %s225, 2
      %s227 = scalar_lea.vmem %s1, %s226
      // Predicated region
      $region33: #{spatial_attention.2} parent=23 // pred_check
        %p228 = pneg %p70
      $region34: #{spatial_attention.2} parent=23 // pred_check_branch
        %230 = sbr.rel (%p228) target = $region36
      $region35: #{spatial_attention.2} parent=23 // pred_region
        _
      $region36: #{spatial_attention.2} parent=23 // pred_fallthru
        _
    $region24: #{spatial_attention.2} parent=5 // pred_fallthru
      _
    %p231 = scmp.le.s32.totalorder 2, %s7
    // Predicated region
    $region37: #{spatial_attention.2} parent=5 // pred_check
      %p232 = pneg %p231
    $region38: #{spatial_attention.2} parent=5 // pred_check_branch
      %234 = sbr.rel (%p232) target = $region40
    $region39: #{spatial_attention.2} parent=5 // pred_region
      %s235 = ssub.s32 %s7, 2
      // Predicated region
      $region41: #{spatial_attention.2} parent=39 // pred_check
        %p236 = pneg %p76
      $region42: #{spatial_attention.2} parent=39 // pred_check_branch
        %238 = sbr.rel (%p236) target = $region44
      $region43: #{spatial_attention.2} parent=39 // pred_region
        %p239 = scmp.lt.s32.totalorder %s18, 1
        %s240 = scalar_select %p239, %s18, 1
        %s241 = smul.addr %s240, 2
        %s242 = smul.addr %s241, 2
        %s243 = scalar_lea.vmem %s1, %s242
      $region44: #{spatial_attention.2} parent=39 // pred_fallthru
        _
    $region40: #{spatial_attention.2} parent=5 // pred_fallthru
      _
  $region6: #{spatial_attention.2} parent=0 // loop_footer
    %s11 = sadd.s32 1, %s7
  $region7: #{spatial_attention.2} parent=0 // loop_footer_branch
    %6 = sbr.rel target = $region3
  $region8: #{spatial_attention.2} parent=0 // loop_exit
    _

// kernel: spatial_attention.3
$region0: #{spatial_attention.3}
  #allocation0 [shape = 'u32[]', space=smem, size = 0x4, offset = 0x4, fixed_abs, tag = 'smem constant byte address 0x4 - core index']
  #allocation1 [shape = 'u32[72,128]{1,0:T(1,128)}', space=vmem, size = 0x9000, scoped, tag = 'internal scratch']
  #allocation2 [shape = 'f32[22,32]{1,0:T(8,128)}', space=vmem, size = 0x3000, scoped, tag = 'scratch operand']
  %s0 = inlined_call_operand.vmem [shape: f32[2,2,16,16], index: 0, kind: input, shape index: {}]
  %s1 = inlined_call_operand.vmem [shape: f32[7,32,16], index: 1, kind: input, shape index: {}]
  %s2 = inlined_call_operand.hbm [shape: f32[2,1,16,16], index: 2, kind: output, shape index: {}]
  %s3 = sld [smem:[#allocation0]]
  $region41: #{spatial_attention.3} parent=0
    _
  %s5 = ssub.s32 1, %s3
  %s6 = scalar_select 0, %s5, %s3
  $region1: #{spatial_attention.3} parent=0
    #allocation3 [shape = 'u8[16384]{0}', space=vmem, size = 0x4000, scoped, tag = 'output window, operand 0']
    #allocation4 [shape = 's32[2]{0}', space=sflag, size = 0x8, scoped, tag = 'scoped memory for spatial_attention.3']
    %7 = vsyncpa [#allocation4], 0
    %s8 = scalar_lea.sflag [#allocation4], 1
    %9 = vsyncpa %s8, 0
    loop: start=0, step=1, limit=4
    $region2: #{spatial_attention.3} parent=1 // loop_pre_header
      _
    $region3: #{spatial_attention.3} parent=1 // loop_header
      %s11 = sphi 0, %s15
      %p12 = scmp.ge.s32.totalorder %s11, 4
      %s21 = sphi 0, %s23
      %s24 = sphi 0, %s21
      %s25 = sphi 0, %s24
      %s41 = sphi 0, %s25
      %s45 = sphi 0, %s45
      %s47 = sphi 0, %s45
      %s48 = sphi 0, %s47
      %s62 = sphi 0, %s48
      %s68 = sphi 0, %s70
      %s71 = sphi 0, %s68
      %s72 = sphi 0, %s71
      %s88 = sphi 0, %s72
    $region4: #{spatial_attention.3} parent=1 // loop_header_branch
      %14 = sbr.rel (%p12) target = $region8
    $region5: #{spatial_attention.3} parent=1 // loop_body
      %s16 = ssub.s32 %s11, 1
      %s17 = ssub.s32 %s11, 2
      %s18 = sadd.s32 %s11, 1
      %s19 = ssub.s32 %s11, %s18
      %p20 = scmp.eq.s32.totalorder %s19, 0
      %s22 = sadd.s32 %s21, 1
      %s23 = scalar_select %p20, %s21, %s22
      %p26 = pneg %p20
      %p27 = scmp.eq.s32.totalorder %s11, 1
      %p28 = por %p26, %p27
      %p29 = scmp.ne.s32.totalorder %s21, %s24
      %p30 = scmp.eq.s32.totalorder %s11, 0
      %p31 = por %p29, %p30
      %p32 = scmp.ne.s32.totalorder %s21, %s24
      %p33 = scmp.eq.s32.totalorder %s16, 1
      %p34 = por %p32, %p33
      %p35 = scmp.ne.s32.totalorder %s24, %s25
      %p36 = scmp.eq.s32.totalorder %s16, 0
      %p37 = por %p35, %p36
      %p38 = scmp.ne.s32.totalorder %s24, %s25
      %p39 = scmp.eq.s32.totalorder %s17, 1
      %p40 = por %p38, %p39
      %p42 = scmp.ne.s32.totalorder %s25, %s41
      %p43 = scmp.eq.s32.totalorder %s17, 0
      %p44 = por %p42, %p43
      %s46 = sadd.s32 %s45, 1
      %p49 = scmp.eq.s32.totalorder %s11, 1
      %p50 = scmp.ne.s32.totalorder %s45, %s47
      %p51 = scmp.eq.s32.totalorder %s11, 0
      %p52 = por %p50, %p51
      %p53 = scmp.ne.s32.totalorder %s45, %s47
      %p54 = scmp.eq.s32.totalorder %s16, 1
      %p55 = por %p53, %p54
      %p56 = scmp.ne.s32.totalorder %s47, %s48
      %p57 = scmp.eq.s32.totalorder %s16, 0
      %p58 = por %p56, %p57
      %p59 = scmp.ne.s32.totalorder %s47, %s48
      %p60 = scmp.eq.s32.totalorder %s17, 1
      %p61 = por %p59, %p60
      %p63 = scmp.ne.s32.totalorder %s48, %s62
      %p64 = scmp.eq.s32.totalorder %s17, 0
      %p65 = por %p63, %p64
      %s66 = ssub.s32 %s11, %s18
      %p67 = scmp.eq.s32.totalorder %s66, 0
      %s69 = sadd.s32 %s68, 1
      %s70 = scalar_select %p67, %s68, %s69
      %p73 = pneg %p67
      %p74 = scmp.eq.s32.totalorder %s11, 1
      %p75 = por %p73, %p74
      %p76 = scmp.ne.s32.totalorder %s68, %s71
      %p77 = scmp.eq.s32.totalorder %s11, 0
      %p78 = por %p76, %p77
      %p79 = scmp.ne.s32.totalorder %s68, %s71
      %p80 = scmp.eq.s32.totalorder %s16, 1
      %p81 = por %p79, %p80
      %p82 = scmp.ne.s32.totalorder %s71, %s72
      %p83 = scmp.eq.s32.totalorder %s16, 0
      %p84 = por %p82, %p83
      %p85 = scmp.ne.s32.totalorder %s71, %s72
      %p86 = scmp.eq.s32.totalorder %s17, 1
      %p87 = por %p85, %p86
      %p89 = scmp.ne.s32.totalorder %s72, %s88
      %p90 = scmp.eq.s32.totalorder %s17, 0
      %p91 = por %p89, %p90
      %p92 = scmp.le.s32.totalorder 1, %s11
      %p93 = scmp.lt.s32.totalorder %s11, 3
      %p94 = pnand %p92, %p93
      %p95 = pneg %p94
      // Predicated region
      $region9: #{spatial_attention.3} parent=5 // pred_check
        _
      $region10: #{spatial_attention.3} parent=5 // pred_check_branch
        %97 = sbr.rel (%p94) target = $region12
      $region11: #{spatial_attention.3} parent=5 // pred_region
        %s98 = ssub.s32 %s11, 1
        // Predicated region
        $region13: #{spatial_attention.3} parent=11 // pred_check
          %p99 = pneg %p58
        $region14: #{spatial_attention.3} parent=11 // pred_check_branch
          %101 = sbr.rel (%p99) target = $region16
        $region15: #{spatial_attention.3} parent=11 // pred_region
          _
        $region16: #{spatial_attention.3} parent=11 // pred_fallthru
          _
      $region12: #{spatial_attention.3} parent=5 // pred_fallthru
        _
      %p102 = scmp.lt.s32.totalorder %s11, 2
      // Predicated region
      $region17: #{spatial_attention.3} parent=5 // pred_check
        %p103 = pneg %p102
      $region18: #{spatial_attention.3} parent=5 // pred_check_branch
        %105 = sbr.rel (%p103) target = $region20
      $region19: #{spatial_attention.3} parent=5 // pred_region
        // Predicated region
        $region21: #{spatial_attention.3} parent=19 // pred_check
          %p106 = pneg %p31
        $region22: #{spatial_attention.3} parent=19 // pred_check_branch
          %108 = sbr.rel (%p106) target = $region24
        $region23: #{spatial_attention.3} parent=19 // pred_region
          %p109 = scmp.lt.s32.totalorder %s11, 1
          %s110 = scalar_select %p109, %s11, 1
          %s111 = smul.addr %s110, 4
          %s112 = smul.addr %s111, 8
          %s113 = scalar_lea.vmem %s0, %s112
        $region24: #{spatial_attention.3} parent=19 // pred_fallthru
          _
      $region20: #{spatial_attention.3} parent=5 // pred_fallthru
        _
      %p114 = scmp.le.s32.totalorder 1, %s11
      %p115 = scmp.lt.s32.totalorder %s11, 3
      %p116 = pnand %p114, %p115
      %p117 = pneg %p116
      // Predicated region
      $region25: #{spatial_attention.3} parent=5 // pred_check
        _
      $region26: #{spatial_attention.3} parent=5 // pred_check_branch
        %119 = sbr.rel (%p116) target = $region28
      $region27: #{spatial_attention.3} parent=5 // pred_region
        %s120 = ssub.s32 %s11, 1
        %p121 = scmp.lt.s32.totalorder %s16, 1
        %s122 = scalar_select %p121, %s16, 1
        %s123 = smul.addr %s122, 4
        %s124 = smul.addr %s123, 8
        %s125 = scalar_lea.vmem %s0, %s124
        %p126 = pneg %p37
        %p127 = pneg %p34
        %p128 = pneg %p58
        %p129 = pneg %p55
        %p130 = pneg %p84
        %p131 = pneg %p81
        %s132 = sand.u32 %s71, 1
        %s133 = scalar_lea.sflag [#allocation4], %s132
        %s134 = sand.u32 %s71, 1
        %s135 = smul.addr %s134, 16
        %s136 = scalar_lea.vmem [#allocation3], %s135
        %p137 = scmp.lt.s32.totalorder %s16, 1
        %s138 = scalar_select %p137, %s16, 1
        %s139 = smul.addr %s138, 4
        %s140 = smul.addr %s139, 8
        %s141 = scalar_lea.vmem %s0, %s140
        %vm142 = vcmask 256000
        %143 = vst.msk [vmem:[#allocation2] sm:$0x7] %vm142, 0.0
        %144 = vst.msk [vmem:[#allocation2 + $0x13] sm:$0x7] %vm142, 0.0
        %v145 = vld [vmem:[%s141] sm:$0xff]
        %v146 = vld [vmem:[%s141 + $0x8] sm:$0xff]
        %vm147 = vcmask 130048
        %148 = vst.msk [vmem:[#allocation2 + $0x3] sm:$0xff] %vm147, %v145
        %149 = vst.msk [vmem:[#allocation2 + $0xb] sm:$0xff] %vm147, %v146
        %s150 = scalar_lea.vmem %s141, 16
        %v151 = vld [vmem:[%s150] sm:$0xff]
        %v152 = vld [vmem:[%s150 + $0x8] sm:$0xff]
        %155 = vrot.lane.b32.xlu0 %v151, 16
        %v156 = vpop.permute.xlu0 %155
        %157 = vrot.lane.b32.xlu0 %v152, 16
        %v158 = vpop.permute.xlu0 %157
        %vm161 = vcmask 261248
        %162 = vst.msk [vmem:[#allocation2 + $0x3] sm:$0xff] %vm161, %v156
        %163 = vst.msk [vmem:[#allocation2 + $0xb] sm:$0xff] %vm161, %v158
        %v164 = vld [vmem:[#allocation2] sm:$0xff]
        %v165 = vld [vmem:[#allocation2 + $0x8] sm:$0xff]
        %v166 = vld [vmem:[%s1] sm:$0xff]
        %v167 = vld [vmem:[%s1 + $0x8] sm:$0xff]
        %v168 = vld [vmem:[%s1 + $0x10] sm:$0xff]
        %v169 = vld [vmem:[%s1 + $0x18] sm:$0xff]
        %v170 = vld [vmem:[#allocation2 + $0x1] sm:$0xff]
        %v171 = vld [vmem:[#allocation2 + $0x9] sm:$0xff]
        %s172 = scalar_lea.vmem %s1, 32
        %v173 = vld [vmem:[%s172] sm:$0xff]
        %v174 = vld [vmem:[%s172 + $0x8] sm:$0xff]
        %v175 = vld [vmem:[%s172 + $0x10] sm:$0xff]
        %v176 = vld [vmem:[%s172 + $0x18] sm:$0xff]
        %vm177 = vcmask 261120
        %v179 = vsel %vm177, %v170, 0
        %v182 = vsel %vm177, %v171, 0
        %184 = vmatpush.msra.mxu0 0.0
        %185 = vmatpush.msra.mxu0 0.0
        %186 = vmatpush.msra.mxu0 0.0
        %187 = vmatpush.msra.mxu0 0.0
        %188 = vmatpush.msra.mxu0 0.0
        %189 = vmatpush.msra.mxu0 0.0
        %190 = vmatpush.msra.mxu0 0.0
        %191 = vmatpush.msra.mxu0 0.0
        %192 = vmatpush.msra.mxu0 0.0
        %193 = vmatpush.msra.mxu0 0.0
        %194 = vmatpush.msra.mxu0 0.0
        %195 = vmatpush.msra.mxu0 0.0
        %196 = vmatpush.msra.mxu0 %v176
        %197 = vmatpush.msra.mxu0 %v175
        %198 = vmatpush.msra.mxu0 %v174
        %199 = vmatpush.msra.mxu0 %v173
        %200 = vmatmul.f32.gmra.mxu0 %v179
        %v201 = vpop.f32.mrf.mxu0
        %v202 = vadd.f32 0.0, %v201
        %203 = vmatmul.f32.gmra.mxu0 %v182
        %v204 = vpop.f32.mrf.mxu0
        %v205 = vadd.f32 0.0, %v204
        %206 = vdwg.mxu0
        %v207 = vld [vmem:[#allocation2 + $0x2] sm:$0xff]
        %v208 = vld [vmem:[#allocation2 + $0xa] sm:$0xff]
        %s209 = scalar_lea.vmem %s1, 64
        %v210 = vld [vmem:[%s209] sm:$0xff]
        %v211 = vld [vmem:[%s209 + $0x8] sm:$0xff]
        %v212 = vld [vmem:[%s209 + $0x10] sm:$0xff]
        %v213 = vld [vmem:[%s209 + $0x18] sm:$0xff]
        %v214 = vld [vmem:[#allocation2 + $0x3] sm:$0xff]
        %v215 = vld [vmem:[#allocation2 + $0xb] sm:$0xff]
        %s216 = scalar_lea.vmem %s1, 96
        %v217 = vld [vmem:[%s216] sm:$0xff]
        %v218 = vld [vmem:[%s216 + $0x8] sm:$0xff]
        %v219 = vld [vmem:[%s216 + $0x10] sm:$0xff]
        %v220 = vld [vmem:[%s216 + $0x18] sm:$0xff]
        %v222 = vsel %vm177, %v214, 0
        %v225 = vsel %vm177, %v215, 0
        %227 = vmatpush.msra.mxu0 0.0
        %228 = vmatpush.msra.mxu0 0.0
        %229 = vmatpush.msra.mxu0 0.0
        %230 = vmatpush.msra.mxu0 0.0
        %231 = vmatpush.msra.mxu0 0.0
        %232 = vmatpush.msra.mxu0 0.0
        %233 = vmatpush.msra.mxu0 0.0
        %234 = vmatpush.msra.mxu0 0.0
        %235 = vmatpush.msra.mxu0 0.0
        %236 = vmatpush.msra.mxu0 0.0
        %237 = vmatpush.msra.mxu0 0.0
        %238 = vmatpush.msra.mxu0 0.0
        %239 = vmatpush.msra.mxu0 %v220
        %240 = vmatpush.msra.mxu0 %v219
        %241 = vmatpush.msra.mxu0 %v218
        %242 = vmatpush.msra.mxu0 %v217
        %243 = vmatmul.f32.gmra.mxu0 %v222
        %v244 = vpop.f32.mrf.mxu0
        %v245 = vadd.f32 0.0, %v244
        %246 = vmatmul.f32.gmra.mxu0 %v225
        %v247 = vpop.f32.mrf.mxu0
        %v248 = vadd.f32 0.0, %v247
        %249 = vdwg.mxu0
        %v250 = vld [vmem:[#allocation2 + $0x4] sm:$0xff]
        %v251 = vld [vmem:[#allocation2 + $0xc] sm:$0xff]
        %s252 = scalar_lea.vmem %s1, 128
        %v253 = vld [vmem:[%s252] sm:$0xff]
        %v254 = vld [vmem:[%s252 + $0x8] sm:$0xff]
        %v255 = vld [vmem:[%s252 + $0x10] sm:$0xff]
        %v256 = vld [vmem:[%s252 + $0x18] sm:$0xff]
        %v257 = vld [vmem:[#allocation2 + $0x5] sm:$0xff]
        %v258 = vld [vmem:[#allocation2 + $0xd] sm:$0xff]
        %s259 = scalar_lea.vmem %s1, 160
        %v260 = vld [vmem:[%s259] sm:$0xff]
        %v261 = vld [vmem:[%s259 + $0x8] sm:$0xff]
        %v262 = vld [vmem:[%s259 + $0x10] sm:$0xff]
        %v263 = vld [vmem:[%s259 + $0x18] sm:$0xff]
        %v265 = vsel %vm177, %v257, 0
        %v268 = vsel %vm177, %v258, 0
        %270 = vmatpush.msra.mxu0 0.0
        %271 = vmatpush.msra.mxu0 0.0
        %272 = vmatpush.msra.mxu0 0.0
        %273 = vmatpush.msra.mxu0 0.0
        %274 = vmatpush.msra.mxu0 0.0
        %275 = vmatpush.msra.mxu0 0.0
        %276 = vmatpush.msra.mxu0 0.0
        %277 = vmatpush.msra.mxu0 0.0
        %278 = vmatpush.msra.mxu0 0.0
        %279 = vmatpush.msra.mxu0 0.0
        %280 = vmatpush.msra.mxu0 0.0
        %281 = vmatpush.msra.mxu0 0.0
        %282 = vmatpush.msra.mxu0 %v263
        %283 = vmatpush.msra.mxu0 %v262
        %284 = vmatpush.msra.mxu0 %v261
        %285 = vmatpush.msra.mxu0 %v260
        %286 = vmatmul.f32.gmra.mxu0 %v265
        %v287 = vpop.f32.mrf.mxu0
        %v288 = vadd.f32 0.0, %v287
        %289 = vmatmul.f32.gmra.mxu0 %v268
        %v290 = vpop.f32.mrf.mxu0
        %v291 = vadd.f32 0.0, %v290
        %292 = vdwg.mxu0
        %v293 = vld [vmem:[#allocation2 + $0x6] sm:$0xff]
        %v294 = vld [vmem:[#allocation2 + $0xe] sm:$0xff]
        %s295 = scalar_lea.vmem %s1, 192
        %v296 = vld [vmem:[%s295] sm:$0xff]
        %v297 = vld [vmem:[%s295 + $0x8] sm:$0xff]
        %v298 = vld [vmem:[%s295 + $0x10] sm:$0xff]
        %v299 = vld [vmem:[%s295 + $0x18] sm:$0xff]
        %v301 = vsel %vm177, %v293, 0
        %v304 = vsel %vm177, %v294, 0
        %306 = vmatpush.msra.mxu0 0.0
        %307 = vmatpush.msra.mxu0 0.0
        %308 = vmatpush.msra.mxu0 0.0
        %309 = vmatpush.msra.mxu0 0.0
        %310 = vmatpush.msra.mxu0 0.0
        %311 = vmatpush.msra.mxu0 0.0
        %312 = vmatpush.msra.mxu0 0.0
        %313 = vmatpush.msra.mxu0 0.0
        %314 = vmatpush.msra.mxu0 0.0
        %315 = vmatpush.msra.mxu0 0.0
        %316 = vmatpush.msra.mxu0 0.0
        %317 = vmatpush.msra.mxu0 0.0
        %318 = vmatpush.msra.mxu0 %v299
        %319 = vmatpush.msra.mxu0 %v298
        %320 = vmatpush.msra.mxu0 %v297
        %321 = vmatpush.msra.mxu0 %v296
        %322 = vmatmul.f32.gmra.mxu0 %v301
        %v323 = vpop.f32.mrf.mxu0
        %v324 = vadd.f32 0.0, %v323
        %325 = vmatmul.f32.gmra.mxu0 %v304
        %v326 = vpop.f32.mrf.mxu0
        %v327 = vadd.f32 0.0, %v326
        %328 = vdwg.mxu0
        %v330 = vsel %vm177, %v164, 0
        %v333 = vsel %vm177, %v165, 0
        %335 = vmatpush.msra.mxu0 0.0
        %336 = vmatpush.msra.mxu0 0.0
        %337 = vmatpush.msra.mxu0 0.0
        %338 = vmatpush.msra.mxu0 0.0
        %339 = vmatpush.msra.mxu0 0.0
        %340 = vmatpush.msra.mxu0 0.0
        %341 = vmatpush.msra.mxu0 0.0
        %342 = vmatpush.msra.mxu0 0.0
        %343 = vmatpush.msra.mxu0 0.0
        %344 = vmatpush.msra.mxu0 0.0
        %345 = vmatpush.msra.mxu0 0.0
        %346 = vmatpush.msra.mxu0 0.0
        %347 = vmatpush.msra.mxu0 %v169
        %348 = vmatpush.msra.mxu0 %v168
        %349 = vmatpush.msra.mxu0 %v167
        %350 = vmatpush.msra.mxu0 %v166
        %351 = vmatmul.f32.gmra.mxu0 %v330
        %v352 = vpop.f32.mrf.mxu0
        %v353 = vadd.f32 %v202, %v352
        %354 = vmatmul.f32.gmra.mxu0 %v333
        %v355 = vpop.f32.mrf.mxu0
        %v356 = vadd.f32 %v205, %v355
        %357 = vdwg.mxu0
        %v359 = vsel %vm177, %v207, 0
        %v362 = vsel %vm177, %v208, 0
        %364 = vmatpush.msra.mxu0 0.0
        %365 = vmatpush.msra.mxu0 0.0
        %366 = vmatpush.msra.mxu0 0.0
        %367 = vmatpush.msra.mxu0 0.0
        %368 = vmatpush.msra.mxu0 0.0
        %369 = vmatpush.msra.mxu0 0.0
        %370 = vmatpush.msra.mxu0 0.0
        %371 = vmatpush.msra.mxu0 0.0
        %372 = vmatpush.msra.mxu0 0.0
        %373 = vmatpush.msra.mxu0 0.0
        %374 = vmatpush.msra.mxu0 0.0
        %375 = vmatpush.msra.mxu0 0.0
        %376 = vmatpush.msra.mxu0 %v213
        %377 = vmatpush.msra.mxu0 %v212
        %378 = vmatpush.msra.mxu0 %v211
        %379 = vmatpush.msra.mxu0 %v210
        %380 = vmatmul.f32.gmra.mxu0 %v359
        %v381 = vpop.f32.mrf.mxu0
        %v382 = vadd.f32 %v245, %v381
        %383 = vmatmul.f32.gmra.mxu0 %v362
        %v384 = vpop.f32.mrf.mxu0
        %v385 = vadd.f32 %v248, %v384
        %386 = vdwg.mxu0
        %v388 = vsel %vm177, %v250, 0
        %v391 = vsel %vm177, %v251, 0
        %393 = vmatpush.msra.mxu0 0.0
        %394 = vmatpush.msra.mxu0 0.0
        %395 = vmatpush.msra.mxu0 0.0
        %396 = vmatpush.msra.mxu0 0.0
        %397 = vmatpush.msra.mxu0 0.0
        %398 = vmatpush.msra.mxu0 0.0
        %399 = vmatpush.msra.mxu0 0.0
        %400 = vmatpush.msra.mxu0 0.0
        %401 = vmatpush.msra.mxu0 0.0
        %402 = vmatpush.msra.mxu0 0.0
        %403 = vmatpush.msra.mxu0 0.0
        %404 = vmatpush.msra.mxu0 0.0
        %405 = vmatpush.msra.mxu0 %v256
        %406 = vmatpush.msra.mxu0 %v255
        %407 = vmatpush.msra.mxu0 %v254
        %408 = vmatpush.msra.mxu0 %v253
        %409 = vmatmul.f32.gmra.mxu0 %v388
        %v410 = vpop.f32.mrf.mxu0
        %v411 = vadd.f32 %v288, %v410
        %412 = vmatmul.f32.gmra.mxu0 %v391
        %v413 = vpop.f32.mrf.mxu0
        %v414 = vadd.f32 %v291, %v413
        %415 = vdwg.mxu0
        %v416 = vadd.f32 %v353, %v382
        %v417 = vadd.f32 %v356, %v385
        %v418 = vadd.f32 %v411, %v324
        %v419 = vadd.f32 %v414, %v327
        %v420 = vadd.f32 %v416, %v418
        %v421 = vadd.f32 %v417, %v419
        %v422 = vxor.u32 %v420, 2147483648
        %v423 = vxor.u32 %v421, 2147483648
        %v424 = vmul.f32 %v422, 1.442695
        %v425 = vpow.pop %v424
        %v426 = vmul.f32 %v423, 1.442695
        %v427 = vpow.pop %v426
        %v428 = vadd.f32 %v425, 1.0
        %v429 = vadd.f32 %v427, 1.0
        %v430 = vrcp.pop %v428
        %v431 = vmul.f32 %v428, %v430
        %v432 = vsub.f32 1.0, %v431
        %v433 = vmul.f32 %v430, %v432
        %v434 = vadd.f32 %v430, %v433
        %vm435 = vweird.f32 %v428
        %vm436 = vweird.f32 %v430
        %vm437 = vmor %vm435, %vm436
        %v438 = vsel %vm437, %v430, %v434
        %v439 = vand.u32 2147483647, %v428
        %vm440 = vcmp.eq.f32.partialorder %v439, 8.507059e+37
        %v441 = vand.u32 %v428, 2147483648
        %v442 = vor.u32 1.1754944e-38, %v441
        %v443 = vsel %vm440, %v442, %v438
        %v444 = vmul.f32 1.0, %v443
        %v445 = vrcp.pop %v429
        %v446 = vmul.f32 %v429, %v445
        %v447 = vsub.f32 1.0, %v446
        %v448 = vmul.f32 %v445, %v447
        %v449 = vadd.f32 %v445, %v448
        %vm450 = vweird.f32 %v429
        %vm451 = vweird.f32 %v445
        %vm452 = vmor %vm450, %vm451
        %v453 = vsel %vm452, %v445, %v449
        %v454 = vand.u32 2147483647, %v429
        %vm455 = vcmp.eq.f32.partialorder %v454, 8.507059e+37
        %v456 = vand.u32 %v429, 2147483648
        %v457 = vor.u32 1.1754944e-38, %v456
        %v458 = vsel %vm455, %v457, %v453
        %v459 = vmul.f32 1.0, %v458
        %460 = vst.msk [vmem:[%s136] sm:$0xff] %vm147, %v444
        %461 = vst.msk [vmem:[%s136 + $0x8] sm:$0xff] %vm147, %v459
        %s462 = sand.u32 %s71, 1
        %s463 = scalar_lea.sflag [#allocation4], %s462
        %s464 = sand.u32 %s71, 1
        %s465 = smul.addr %s464, 16
        %s466 = scalar_lea.vmem [#allocation3], %s465
        // Predicated region
        $region29: #{spatial_attention.3} parent=27 // pred_check
          %p467 = pneg %p81
        $region30: #{spatial_attention.3} parent=27 // pred_check_branch
          %469 = sbr.rel (%p467) target = $region32
        $region31: #{spatial_attention.3} parent=27 // pred_region
          %471 = vsyncadd %s463, 0
          %s472 = smul.addr %s16, 2
          %s473 = smul.addr %s472, 8
          %s474 = scalar_lea.hbm %s2, %s473
          %s475 = sshll.u32 %s466, 4
          %s476 = int_to_ptr.vmem [resolvable:$true] %s475
          %s477 = sshll.u32 %s474, 4
          %s478 = int_to_ptr.hbm [resolvable:$true] %s477
          %483 = dma.vmem_to_hbm [thread:$0]  %s476, 256, %s478, %s463, 128, 128, 8
        $region32: #{spatial_attention.3} parent=27 // pred_fallthru
          _
      $region28: #{spatial_attention.3} parent=5 // pred_fallthru
        _
      %p484 = scmp.le.s32.totalorder 2, %s11
      // Predicated region
      $region33: #{spatial_attention.3} parent=5 // pred_check
        %p485 = pneg %p484
      $region34: #{spatial_attention.3} parent=5 // pred_check_branch
        %487 = sbr.rel (%p485) target = $region36
      $region35: #{spatial_attention.3} parent=5 // pred_region
        %s488 = ssub.s32 %s11, 2
        // Predicated region
        $region37: #{spatial_attention.3} parent=35 // pred_check
          %p489 = pneg %p87
        $region38: #{spatial_attention.3} parent=35 // pred_check_branch
          %491 = sbr.rel (%p489) target = $region40
        $region39: #{spatial_attention.3} parent=35 // pred_region
          %s492 = sand.u32 %s72, 1
          %s493 = scalar_lea.sflag [#allocation4], %s492
          %s494 = sand.u32 %s72, 1
          %s495 = smul.addr %s494, 16
          %s496 = scalar_lea.vmem [#allocation3], %s495
          %498 = dma.done %s493, 256
        $region40: #{spatial_attention.3} parent=35 // pred_fallthru
          _
      $region36: #{spatial_attention.3} parent=5 // pred_fallthru
        _
    $region6: #{spatial_attention.3} parent=1 // loop_footer
      %s15 = sadd.s32 1, %s11
    $region7: #{spatial_attention.3} parent=1 // loop_footer_branch
      %10 = sbr.rel target = $region3
    $region8: #{spatial_attention.3} parent=1 // loop_exit
      _
    %499 = vsyncpa [#allocation4], 1
    %s500 = scalar_lea.sflag [#allocation4], 1
    %501 = vsyncpa %s500, 1

</llo_original>
